<compile_context>
chip_gen: v5e
topology: v5e:2x2
jax: 0.10.0
libtpu: 0.0.40
codegen_flags: <defaults>
</compile_context>

<pallas_src>
import jax
import jax.numpy as jnp
from jax.experimental import pallas as pl
from jax.experimental.pallas import tpu as pltpu

BN_EPS = 1e-5

# ---- packed parameter-slab row layout (all 128 lanes wide, f32) ----
R_VEC = 0      # rows  0..15 : w1 rows, BN gamma/beta, biases
R_W2 = 16      # rows 16..79 : w2  (64, 128)
R_W3 = 80      # rows 80..207: w3  (128, 64) padded to 128 lanes
R_W4 = 208     # rows 208..335: w4 (64, 32)  padded to 128 rows/lanes
R_W5 = 336     # rows 336..463: w5 (32, 2)   padded to 128 rows/lanes
SLAB_ROWS = 464


def _mlp_kernel(x_ref, slab_ref, o_ref):
    B = x_ref.shape[0]
    inv_b = 1.0 / B
    x = x_ref[...]                      # (B, 2) f32

    # ---- single-DMA parameter slab: tile-aligned static views ----
    vec = slab_ref[R_VEC:R_VEC + 16, :]      # (16, 128) one aligned load
    w2 = slab_ref[R_W2:R_W2 + 64, :]         # (64, 128)
    w3 = slab_ref[R_W3:R_W3 + 128, :]        # (128, 128), lanes >=64 are 0
    w4 = slab_ref[R_W4:R_W4 + 128, :]        # (128, 128), rows >=64 / lanes >=32 are 0
    w5 = slab_ref[R_W5:R_W5 + 128, :]        # (128, 128), rows >=32 / lanes >=2  are 0

    w1r0 = vec[0:1, 0:64]                    # w1 row 0
    w1r1 = vec[1:2, 0:64]                    # w1 row 1
    g1, be1 = vec[2:3, 0:64], vec[3:4, 0:64]
    g2, be2 = vec[4:5, :], vec[5:6, :]
    b3 = vec[6:7, :]                         # zeros past lane 64
    b4 = vec[7:8, :]                         # zeros past lane 32
    b5 = vec[8:9, :]                         # zeros past lane 2

    def bn_relu(h, g, be):
        # One reduction sweep: sum and sum-of-squares -> folded scale/shift.
        s = jnp.sum(h, axis=0, keepdims=True)
        ss = jnp.sum(h * h, axis=0, keepdims=True)
        mean = s * inv_b
        var = jnp.maximum(ss * inv_b - mean * mean, 0.0)   # clamp: no NaN
        scale = g * jax.lax.rsqrt(var + BN_EPS)            # EUP
        shift = be - mean * scale
        return jnp.maximum(h * scale + shift, 0.0)

    # ---- Linear(2 -> 64): K=2 contraction as two VPU broadcast FMAs.
    #      (bias omitted: dead under training-mode BN)
    h = x[:, 0:1] * w1r0 + x[:, 1:2] * w1r1                # (B, 64)
    h = bn_relu(h, g1, be1)

    # ---- Linear(64 -> 128) (bias omitted, dead under BN) + BN + ReLU
    h = jnp.dot(h, w2, preferred_element_type=jnp.float32)  # (B, 128)
    h = bn_relu(h, g2, be2)

    # ---- Linear(128 -> 64) + ReLU   (lanes >=64 stay exactly 0)
    h = jnp.maximum(jnp.dot(h, w3, preferred_element_type=jnp.float32) + b3,
                    0.0)

    # ---- Linear(64 -> 32) + ReLU    (lanes >=32 stay exactly 0)
    h = jnp.maximum(jnp.dot(h, w4, preferred_element_type=jnp.float32) + b4,
                    0.0)

    # ---- Linear(32 -> 2)
    h = jnp.dot(h, w5, preferred_element_type=jnp.float32) + b5

    # True (B, 2) output: one masked vst per 8 rows, no padded writeback.
    o_ref[...] = h[:, 0:2].astype(o_ref.dtype)


def pack_params(params):
    """Pack PyTorch-layout params into a single (464, 128) f32 slab."""
    (w1, b1, g1, be1, w2, b2, g2, be2, w3, b3, w4, b4, w5, b5) = params
    del b1, b2  # dead: cancelled by training-mode BatchNorm mean-centering

    slab = jnp.zeros((SLAB_ROWS, 128), jnp.float32)
    # vector block
    slab = slab.at[0, :64].set(w1[0])
    slab = slab.at[1, :64].set(w1[1])
    slab = slab.at[2, :64].set(g1[0])
    slab = slab.at[3, :64].set(be1[0])
    slab = slab.at[4, :128].set(g2[0])
    slab = slab.at[5, :128].set(be2[0])
    slab = slab.at[6, :64].set(b3[0])
    slab = slab.at[7, :32].set(b4[0])
    slab = slab.at[8, :2].set(b5[0])
    # weight matrices (zero-padded to 128 lanes / 128 rows where needed)
    slab = slab.at[R_W2:R_W2 + 64, :128].set(w2)   # (64, 128)
    slab = slab.at[R_W3:R_W3 + 128, :64].set(w3)   # (128, 64)
    slab = slab.at[R_W4:R_W4 + 64, :32].set(w4)    # (64, 32)
    slab = slab.at[R_W5:R_W5 + 32, :2].set(w5)     # (32, 2)
    return slab


def mlp_forward(x, slab):
    """x: (B, 2) f32, slab = pack_params(params). Returns (B, 2)."""
    B = x.shape[0]
    vmem = pl.BlockSpec(memory_space=pltpu.MemorySpace.VMEM)
    return pl.pallas_call(
        _mlp_kernel,
        out_shape=jax.ShapeDtypeStruct((B, 2), jnp.float32),
        in_specs=[vmem, vmem],
        out_specs=vmem,
    )(x, slab)


def init_params(key):
    """PyTorch-default init. Linear: U(-1/sqrt(fan_in), 1/sqrt(fan_in)).
    BatchNorm: weight=1, bias=0."""
    dims = [(2, 64), (64, 128), (128, 64), (64, 32), (32, 2)]
    keys = jax.random.split(key, 2 * len(dims))
    lin = []
    for i, (fan_in, fan_out) in enumerate(dims):
        bound = 1.0 / (fan_in ** 0.5)
        w = jax.random.uniform(keys[2 * i], (fan_in, fan_out), jnp.float32,
                               -bound, bound)
        b = jax.random.uniform(keys[2 * i + 1], (1, fan_out), jnp.float32,
                               -bound, bound)
        lin.append((w, b))

    (w1, b1), (w2, b2), (w3, b3), (w4, b4), (w5, b5) = lin
    g1, be1 = jnp.ones((1, 64), jnp.float32), jnp.zeros((1, 64), jnp.float32)
    g2, be2 = jnp.ones((1, 128), jnp.float32), jnp.zeros((1, 128), jnp.float32)
    return (w1, b1, g1, be1, w2, b2, g2, be2, w3, b3, w4, b4, w5, b5)


def reference_forward(x, params):
    """Plain-JAX reference matching PyTorch exactly (includes b1/b2)."""
    (w1, b1, g1, be1, w2, b2, g2, be2, w3, b3, w4, b4, w5, b5) = params

    def bn(h, g, be):
        m = jnp.mean(h, axis=0, keepdims=True)
        v = jnp.mean((h - m) ** 2, axis=0, keepdims=True)
        return (h - m) / jnp.sqrt(v + BN_EPS) * g + be

    h = x @ w1 + b1
    h = jnp.maximum(bn(h, g1, be1), 0.0)
    h = h @ w2 + b2
    h = jnp.maximum(bn(h, g2, be2), 0.0)
    h = jnp.maximum(h @ w3 + b3, 0.0)
    h = jnp.maximum(h @ w4 + b4, 0.0)
    return h @ w5 + b5


if __name__ == "__main__":
    key = jax.random.PRNGKey(0)
    pkey, xkey = jax.random.split(key)

    params = init_params(pkey)
    slab = pack_params(params)
    x = jax.random.normal(xkey, (8, 2), jnp.float32)  # batch=8, in_features=2

    out = mlp_forward(x, slab)
    out = jax.block_until_ready(out)

    ref = reference_forward(x, params)
    assert out.shape == (8, 2)
    assert jnp.allclose(out, ref, atol=1e-4, rtol=1e-4)

    print("KERNEL_OK")
</pallas_src>

<mosaic_0001>
module attributes {stable_mosaic.version = 11 : i64} {
  func.func @_mlp_kernel(%arg0: memref<8x2xf32, #tpu.memory_space<vmem>>, %arg1: memref<464x128xf32, #tpu.memory_space<vmem>>, %arg2: memref<8x2xf32, #tpu.memory_space<vmem>>) attributes {dimension_semantics = [], scalar_prefetch = 0 : i64, scratch_operands = 0 : i64, tpu.core_type = #tpu.core_type<tc>} {
    %c0 = arith.constant 0 : index
    %c0_0 = arith.constant 0 : index
    %0 = vector.load %arg0[%c0, %c0_0] : memref<8x2xf32, #tpu.memory_space<vmem>>, vector<8x2xf32>
    %c0_1 = arith.constant 0 : index
    %c0_2 = arith.constant 0 : index
    %1 = vector.load %arg1[%c0_1, %c0_2] : memref<464x128xf32, #tpu.memory_space<vmem>>, vector<16x128xf32>
    %c16 = arith.constant 16 : index
    %c0_3 = arith.constant 0 : index
    %2 = vector.load %arg1[%c16, %c0_3] : memref<464x128xf32, #tpu.memory_space<vmem>>, vector<64x128xf32>
    %c80 = arith.constant 80 : index
    %c0_4 = arith.constant 0 : index
    %3 = vector.load %arg1[%c80, %c0_4] : memref<464x128xf32, #tpu.memory_space<vmem>>, vector<128x128xf32>
    %c208 = arith.constant 208 : index
    %c0_5 = arith.constant 0 : index
    %4 = vector.load %arg1[%c208, %c0_5] : memref<464x128xf32, #tpu.memory_space<vmem>>, vector<128x128xf32>
    %c336 = arith.constant 336 : index
    %c0_6 = arith.constant 0 : index
    %5 = vector.load %arg1[%c336, %c0_6] : memref<464x128xf32, #tpu.memory_space<vmem>>, vector<128x128xf32>
    %6 = vector.extract_strided_slice %1 {offsets = [0, 0], sizes = [1, 64], strides = [1, 1]} : vector<16x128xf32> to vector<1x64xf32>
    %7 = vector.extract_strided_slice %1 {offsets = [1, 0], sizes = [1, 64], strides = [1, 1]} : vector<16x128xf32> to vector<1x64xf32>
    %8 = vector.extract_strided_slice %1 {offsets = [2, 0], sizes = [1, 64], strides = [1, 1]} : vector<16x128xf32> to vector<1x64xf32>
    %9 = vector.extract_strided_slice %1 {offsets = [3, 0], sizes = [1, 64], strides = [1, 1]} : vector<16x128xf32> to vector<1x64xf32>
    %10 = vector.extract_strided_slice %1 {offsets = [4, 0], sizes = [1, 128], strides = [1, 1]} : vector<16x128xf32> to vector<1x128xf32>
    %11 = vector.extract_strided_slice %1 {offsets = [5, 0], sizes = [1, 128], strides = [1, 1]} : vector<16x128xf32> to vector<1x128xf32>
    %12 = vector.extract_strided_slice %1 {offsets = [6, 0], sizes = [1, 128], strides = [1, 1]} : vector<16x128xf32> to vector<1x128xf32>
    %13 = vector.extract_strided_slice %1 {offsets = [7, 0], sizes = [1, 128], strides = [1, 1]} : vector<16x128xf32> to vector<1x128xf32>
    %14 = vector.extract_strided_slice %1 {offsets = [8, 0], sizes = [1, 128], strides = [1, 1]} : vector<16x128xf32> to vector<1x128xf32>
    %15 = vector.extract_strided_slice %0 {offsets = [0, 0], sizes = [8, 1], strides = [1, 1]} : vector<8x2xf32> to vector<8x1xf32>
    %16 = vector.broadcast %15 : vector<8x1xf32> to vector<8x64xf32>
    %17 = vector.broadcast %6 : vector<1x64xf32> to vector<8x64xf32>
    %18 = arith.mulf %16, %17 : vector<8x64xf32>
    %19 = vector.extract_strided_slice %0 {offsets = [0, 1], sizes = [8, 1], strides = [1, 1]} : vector<8x2xf32> to vector<8x1xf32>
    %20 = vector.broadcast %19 : vector<8x1xf32> to vector<8x64xf32>
    %21 = vector.broadcast %7 : vector<1x64xf32> to vector<8x64xf32>
    %22 = arith.mulf %20, %21 : vector<8x64xf32>
    %23 = arith.addf %18, %22 : vector<8x64xf32>
    %cst = arith.constant dense<0.000000e+00> : vector<64xf32>
    %24 = vector.multi_reduction <add>, %23, %cst [0] : vector<8x64xf32> to vector<64xf32>
    %25 = vector.shape_cast %24 : vector<64xf32> to vector<1x64xf32>
    %26 = arith.mulf %23, %23 : vector<8x64xf32>
    %cst_7 = arith.constant dense<0.000000e+00> : vector<64xf32>
    %27 = vector.multi_reduction <add>, %26, %cst_7 [0] : vector<8x64xf32> to vector<64xf32>
    %28 = vector.shape_cast %27 : vector<64xf32> to vector<1x64xf32>
    %cst_8 = arith.constant 1.250000e-01 : f32
    %29 = vector.broadcast %cst_8 : f32 to vector<1x64xf32>
    %30 = arith.mulf %25, %29 : vector<1x64xf32>
    %cst_9 = arith.constant 1.250000e-01 : f32
    %31 = vector.broadcast %cst_9 : f32 to vector<1x64xf32>
    %32 = arith.mulf %28, %31 : vector<1x64xf32>
    %33 = arith.mulf %30, %30 : vector<1x64xf32>
    %34 = arith.subf %32, %33 : vector<1x64xf32>
    %cst_10 = arith.constant 0.000000e+00 : f32
    %35 = vector.broadcast %cst_10 : f32 to vector<1x64xf32>
    %36 = arith.maximumf %34, %35 : vector<1x64xf32>
    %cst_11 = arith.constant 9.99999974E-6 : f32
    %37 = vector.broadcast %cst_11 : f32 to vector<1x64xf32>
    %38 = arith.addf %36, %37 : vector<1x64xf32>
    %39 = math.rsqrt %38 : vector<1x64xf32>
    %40 = arith.mulf %8, %39 : vector<1x64xf32>
    %41 = arith.mulf %30, %40 : vector<1x64xf32>
    %42 = arith.subf %9, %41 : vector<1x64xf32>
    %43 = vector.broadcast %40 : vector<1x64xf32> to vector<8x64xf32>
    %44 = arith.mulf %23, %43 : vector<8x64xf32>
    %45 = vector.broadcast %42 : vector<1x64xf32> to vector<8x64xf32>
    %46 = arith.addf %44, %45 : vector<8x64xf32>
    %cst_12 = arith.constant 0.000000e+00 : f32
    %47 = vector.broadcast %cst_12 : f32 to vector<8x64xf32>
    %48 = arith.maximumf %46, %47 : vector<8x64xf32>
    %cst_13 = arith.constant dense<0.000000e+00> : vector<8x128xf32>
    %49 = tpu.matmul %48, %2, %cst_13 {dimension_numbers = #tpu.dot_dimension_numbers<[1], [0], [0], [1], [0, 0, 1, 1], [], []>} : vector<8x64xf32>, vector<64x128xf32>, vector<8x128xf32> -> vector<8x128xf32>
    %cst_14 = arith.constant dense<0.000000e+00> : vector<128xf32>
    %50 = vector.multi_reduction <add>, %49, %cst_14 [0] : vector<8x128xf32> to vector<128xf32>
    %51 = vector.shape_cast %50 : vector<128xf32> to vector<1x128xf32>
    %52 = arith.mulf %49, %49 : vector<8x128xf32>
    %cst_15 = arith.constant dense<0.000000e+00> : vector<128xf32>
    %53 = vector.multi_reduction <add>, %52, %cst_15 [0] : vector<8x128xf32> to vector<128xf32>
    %54 = vector.shape_cast %53 : vector<128xf32> to vector<1x128xf32>
    %cst_16 = arith.constant 1.250000e-01 : f32
    %55 = vector.broadcast %cst_16 : f32 to vector<1x128xf32>
    %56 = arith.mulf %51, %55 : vector<1x128xf32>
    %cst_17 = arith.constant 1.250000e-01 : f32
    %57 = vector.broadcast %cst_17 : f32 to vector<1x128xf32>
    %58 = arith.mulf %54, %57 : vector<1x128xf32>
    %59 = arith.mulf %56, %56 : vector<1x128xf32>
    %60 = arith.subf %58, %59 : vector<1x128xf32>
    %cst_18 = arith.constant 0.000000e+00 : f32
    %61 = vector.broadcast %cst_18 : f32 to vector<1x128xf32>
    %62 = arith.maximumf %60, %61 : vector<1x128xf32>
    %cst_19 = arith.constant 9.99999974E-6 : f32
    %63 = vector.broadcast %cst_19 : f32 to vector<1x128xf32>
    %64 = arith.addf %62, %63 : vector<1x128xf32>
    %65 = math.rsqrt %64 : vector<1x128xf32>
    %66 = arith.mulf %10, %65 : vector<1x128xf32>
    %67 = arith.mulf %56, %66 : vector<1x128xf32>
    %68 = arith.subf %11, %67 : vector<1x128xf32>
    %69 = vector.broadcast %66 : vector<1x128xf32> to vector<8x128xf32>
    %70 = arith.mulf %49, %69 : vector<8x128xf32>
    %71 = vector.broadcast %68 : vector<1x128xf32> to vector<8x128xf32>
    %72 = arith.addf %70, %71 : vector<8x128xf32>
    %cst_20 = arith.constant 0.000000e+00 : f32
    %73 = vector.broadcast %cst_20 : f32 to vector<8x128xf32>
    %74 = arith.maximumf %72, %73 : vector<8x128xf32>
    %cst_21 = arith.constant dense<0.000000e+00> : vector<8x128xf32>
    %75 = tpu.matmul %74, %3, %cst_21 {dimension_numbers = #tpu.dot_dimension_numbers<[1], [0], [0], [1], [0, 0, 1, 1], [], []>} : vector<8x128xf32>, vector<128x128xf32>, vector<8x128xf32> -> vector<8x128xf32>
    %76 = vector.broadcast %12 : vector<1x128xf32> to vector<8x128xf32>
    %77 = arith.addf %75, %76 : vector<8x128xf32>
    %cst_22 = arith.constant 0.000000e+00 : f32
    %78 = vector.broadcast %cst_22 : f32 to vector<8x128xf32>
    %79 = arith.maximumf %77, %78 : vector<8x128xf32>
    %cst_23 = arith.constant dense<0.000000e+00> : vector<8x128xf32>
    %80 = tpu.matmul %79, %4, %cst_23 {dimension_numbers = #tpu.dot_dimension_numbers<[1], [0], [0], [1], [0, 0, 1, 1], [], []>} : vector<8x128xf32>, vector<128x128xf32>, vector<8x128xf32> -> vector<8x128xf32>
    %81 = vector.broadcast %13 : vector<1x128xf32> to vector<8x128xf32>
    %82 = arith.addf %80, %81 : vector<8x128xf32>
    %cst_24 = arith.constant 0.000000e+00 : f32
    %83 = vector.broadcast %cst_24 : f32 to vector<8x128xf32>
    %84 = arith.maximumf %82, %83 : vector<8x128xf32>
    %cst_25 = arith.constant dense<0.000000e+00> : vector<8x128xf32>
    %85 = tpu.matmul %84, %5, %cst_25 {dimension_numbers = #tpu.dot_dimension_numbers<[1], [0], [0], [1], [0, 0, 1, 1], [], []>} : vector<8x128xf32>, vector<128x128xf32>, vector<8x128xf32> -> vector<8x128xf32>
    %86 = vector.broadcast %14 : vector<1x128xf32> to vector<8x128xf32>
    %87 = arith.addf %85, %86 : vector<8x128xf32>
    %88 = vector.extract_strided_slice %87 {offsets = [0, 0], sizes = [8, 2], strides = [1, 1]} : vector<8x128xf32> to vector<8x2xf32>
    %c0_26 = arith.constant 0 : index
    %c0_27 = arith.constant 0 : index
    %89 = vector.load %arg2[%c0_26, %c0_27] : memref<8x2xf32, #tpu.memory_space<vmem>>, vector<8x2xf32>
    tpu.vector_store %arg2[%c0_26, %c0_27], %88 {strides = array<i32>} : memref<8x2xf32, #tpu.memory_space<vmem>>, vector<8x2xf32>,
    return
  }
}

</mosaic_0001>

<llo_original>
// kernel: tpu_custom_call.1
$region0: #{tpu_custom_call.1}
  #allocation0 [shape = 'u32[]', space=smem, size = 0x4, offset = 0x4, fixed_abs, tag = 'smem constant byte address 0x4 - core index']
  #allocation1 [shape = 'u32[72,128]{1,0:T(1,128)}', space=vmem, size = 0x9000, scoped, tag = 'internal scratch']
  %s0 = inlined_call_operand.vmem [shape: f32[8,2], index: 0, kind: input, shape index: {}]
  %s1 = inlined_call_operand.hbm [shape: f32[464,128], index: 1, kind: input, shape index: {}]
  %s2 = inlined_call_operand.vmem [shape: f32[8,2], index: 2, kind: output, shape index: {}]
  %s3 = sld [smem:[#allocation0]]
  $region22: #{tpu_custom_call.1} parent=0
    _
  %s5 = ssub.s32 1, %s3
  %s6 = scalar_select 0, %s5, %s3
  $region1: #{tpu_custom_call.1} parent=0
    #allocation2 [shape = 'u8[237568]{0}', space=vmem, size = 0x3a000, scoped, tag = 'input window, operand 1, single buffered']
    #allocation3 [shape = 's32[1]{0}', space=sflag, size = 0x4, scoped, tag = 'scoped memory for tpu_custom_call.1']
    %7 = vsyncpa [#allocation3], 0
    // Predicated region
    $region2: #{tpu_custom_call.1} parent=1 // pred_check
      _
    $region3: #{tpu_custom_call.1} parent=1 // pred_check_branch
      %9 = sbr.rel (0) target = $region5
    $region4: #{tpu_custom_call.1} parent=1 // pred_region
      _
    $region5: #{tpu_custom_call.1} parent=1 // pred_fallthru
      _
    // Predicated region
    $region6: #{tpu_custom_call.1} parent=1 // pred_check
      _
    $region7: #{tpu_custom_call.1} parent=1 // pred_check_branch
      %11 = sbr.rel (0) target = $region9
    $region8: #{tpu_custom_call.1} parent=1 // pred_region
      %13 = vsyncadd [#allocation3], 0
      %s14 = sshll.u32 %s1, 4
      %s15 = int_to_ptr.hbm [resolvable:$true] %s14
      %s16 = sshll.u32 [#allocation2], 4
      %s17 = int_to_ptr.vmem [resolvable:$true] %s16
      %22 = dma.hbm_to_vmem [thread:$0]  %s15, 7424, %s17, [#allocation3], 128, 128, 8
    $region9: #{tpu_custom_call.1} parent=1 // pred_fallthru
      _
    // Predicated region
    $region10: #{tpu_custom_call.1} parent=1 // pred_check
      _
    $region11: #{tpu_custom_call.1} parent=1 // pred_check_branch
      %24 = sbr.rel (0) target = $region13
    $region12: #{tpu_custom_call.1} parent=1 // pred_region
      %26 = dma.done [#allocation3], 7424
    $region13: #{tpu_custom_call.1} parent=1 // pred_fallthru
      _
    %v27 = vld [vmem:[%s0] sm:$0xff]
    %v28 = vld [vmem:[#allocation2] sm:$0xff]
    %v29 = vld [vmem:[#allocation2 + $0x8] sm:$0xff]
    %v30 = vld [vmem:[#allocation2 + $0x10] sm:$0xff]
    %v31 = vld [vmem:[#allocation2 + $0x18] sm:$0xff]
    %v32 = vld [vmem:[#allocation2 + $0x20] sm:$0xff]
    %v33 = vld [vmem:[#allocation2 + $0x28] sm:$0xff]
    %v34 = vld [vmem:[#allocation2 + $0x30] sm:$0xff]
    %v35 = vld [vmem:[#allocation2 + $0x38] sm:$0xff]
    %v36 = vld [vmem:[#allocation2 + $0x40] sm:$0xff]
    %v37 = vld [vmem:[#allocation2 + $0x48] sm:$0xff]
    %v38 = vld [vmem:[#allocation2 + $0x50] sm:$0xff]
    %v39 = vld [vmem:[#allocation2 + $0x58] sm:$0xff]
    %v40 = vld [vmem:[#allocation2 + $0x60] sm:$0xff]
    %v41 = vld [vmem:[#allocation2 + $0x68] sm:$0xff]
    %v42 = vld [vmem:[#allocation2 + $0x70] sm:$0xff]
    %v43 = vld [vmem:[#allocation2 + $0x78] sm:$0xff]
    %v44 = vld [vmem:[#allocation2 + $0x80] sm:$0xff]
    %v45 = vld [vmem:[#allocation2 + $0x88] sm:$0xff]
    %v46 = vld [vmem:[#allocation2 + $0x90] sm:$0xff]
    %v47 = vld [vmem:[#allocation2 + $0x98] sm:$0xff]
    %v48 = vld [vmem:[#allocation2 + $0xa0] sm:$0xff]
    %v49 = vld [vmem:[#allocation2 + $0xa8] sm:$0xff]
    %v50 = vld [vmem:[#allocation2 + $0xb0] sm:$0xff]
    %v51 = vld [vmem:[#allocation2 + $0xb8] sm:$0xff]
    %v52 = vld [vmem:[#allocation2 + $0xc0] sm:$0xff]
    %v53 = vld [vmem:[#allocation2 + $0xc8] sm:$0xff]
    %v54 = vld [vmem:[#allocation2 + $0xd0] sm:$0xff]
    %v55 = vld [vmem:[#allocation2 + $0xd8] sm:$0xff]
    %v56 = vld [vmem:[#allocation2 + $0xe0] sm:$0xff]
    %v57 = vld [vmem:[#allocation2 + $0xe8] sm:$0xff]
    %v58 = vld [vmem:[#allocation2 + $0xf0] sm:$0xff]
    %v59 = vld [vmem:[#allocation2 + $0xf8] sm:$0xff]
    %v60 = vld [vmem:[#allocation2 + $0x100] sm:$0xff]
    %v61 = vld [vmem:[#allocation2 + $0x108] sm:$0xff]
    %v62 = vld [vmem:[#allocation2 + $0x110] sm:$0xff]
    %v63 = vld [vmem:[#allocation2 + $0x118] sm:$0xff]
    %v64 = vld [vmem:[#allocation2 + $0x120] sm:$0xff]
    %v65 = vld [vmem:[#allocation2 + $0x128] sm:$0xff]
    %v66 = vld [vmem:[#allocation2 + $0x130] sm:$0xff]
    %v67 = vld [vmem:[#allocation2 + $0x138] sm:$0xff]
    %v68 = vld [vmem:[#allocation2 + $0x140] sm:$0xff]
    %v69 = vld [vmem:[#allocation2 + $0x148] sm:$0xff]
    %v70 = vld [vmem:[#allocation2 + $0x150] sm:$0xff]
    %v71 = vld [vmem:[#allocation2 + $0x158] sm:$0xff]
    %v72 = vld [vmem:[#allocation2 + $0x160] sm:$0xff]
    %v73 = vld [vmem:[#allocation2 + $0x168] sm:$0xff]
    %v74 = vld [vmem:[#allocation2 + $0x170] sm:$0xff]
    %v75 = vld [vmem:[#allocation2 + $0x178] sm:$0xff]
    %v76 = vld [vmem:[#allocation2 + $0x180] sm:$0xff]
    %v77 = vld [vmem:[#allocation2 + $0x188] sm:$0xff]
    %v78 = vld [vmem:[#allocation2 + $0x190] sm:$0xff]
    %v79 = vld [vmem:[#allocation2 + $0x198] sm:$0xff]
    %v80 = vld [vmem:[#allocation2 + $0x1a0] sm:$0xff]
    %v81 = vld [vmem:[#allocation2 + $0x1a8] sm:$0xff]
    %v82 = vld [vmem:[#allocation2 + $0x1b0] sm:$0xff]
    %v83 = vld [vmem:[#allocation2 + $0x1b8] sm:$0xff]
    %v84 = vld [vmem:[#allocation2 + $0x1c0] sm:$0xff]
    %v85 = vld [vmem:[#allocation2 + $0x1c8] sm:$0xff]
    %87 = vset.pattern.permute.xlu0 0
    %88 = vperm.xlu0 %87, %v27
    %v89 = vpop.permute.xlu0 %88
    %v91 = vperm.slane %v28, 0
    %v92 = vmul.f32 %v89, %v91
    %93 = vset.pattern.permute.xlu0 1
    %94 = vperm.xlu0 %93, %v27
    %v95 = vpop.permute.xlu0 %94
    %v97 = vperm.slane %v28, 1
    %v98 = vmul.f32 %v95, %v97
    %v99 = vadd.f32 %v92, %v98
    %vm100 = vcmask 523264
    %v101 = vsel %vm100, %v99, 0.0
    %v102 = vrot.slane %v101, 4
    %v103 = vadd.f32 %v101, %v102
    %v104 = vrot.slane %v103, 2
    %v105 = vadd.f32 %v103, %v104
    %v106 = vrot.slane %v105, 1
    %v107 = vadd.f32 %v105, %v106
    %v108 = vmul.f32 %v99, %v99
    %v109 = vsel %vm100, %v108, 0.0
    %v110 = vrot.slane %v109, 4
    %v111 = vadd.f32 %v109, %v110
    %v112 = vrot.slane %v111, 2
    %v113 = vadd.f32 %v111, %v112
    %v114 = vrot.slane %v113, 1
    %v115 = vadd.f32 %v113, %v114
    %v116 = vmul.f32 %v107, 0.125
    %v117 = vmul.f32 %v115, 0.125
    %v118 = vmul.f32 %v116, %v116
    %v119 = vsub.f32 %v117, %v118
    %v120 = vmax.f32 %v119, 0.0
    %v121 = vadd.f32 %v120, 1e-05
    %v122 = vrsqrt.pop %v121
    %v123 = vmul.f32 %v122, %v121
    %v124 = vmul.f32 %v123, %v122
    %v125 = vmul.f32 0.5, %v124
    %v126 = vsub.f32 1.5, %v125
    %v127 = vmul.f32 %v122, %v126
    %vm128 = vweird.f32 %v121
    %vm129 = vweird.f32 %v122
    %vm130 = vmor %vm128, %vm129
    %v131 = vsel %vm130, %v122, %v127
    %v132 = vmul.f32 %v28, %v131
    %v133 = vmul.f32 %v116, %v132
    %v135 = vrot.slane %v133, 7
    %v137 = vsub.f32 %v28, %v135
    %v138 = vperm.slane %v132, 2
    %v139 = vmul.f32 %v99, %v138
    %v140 = vperm.slane %v137, 3
    %v141 = vadd.f32 %v139, %v140
    %v142 = vmax.f32 %v141, 0.0
    %v144 = vsel %vm100, %v142, 0
    %146 = vmatpush.msra.mxu0 0.0
    %147 = vmatpush.msra.mxu0 0.0
    %148 = vmatpush.msra.mxu0 0.0
    %149 = vmatpush.msra.mxu0 0.0
    %150 = vmatpush.msra.mxu0 0.0
    %151 = vmatpush.msra.mxu0 0.0
    %152 = vmatpush.msra.mxu0 0.0
    %153 = vmatpush.msra.mxu0 0.0
    %154 = vmatpush.msra.mxu0 %v37
    %155 = vmatpush.msra.mxu0 %v36
    %156 = vmatpush.msra.mxu0 %v35
    %157 = vmatpush.msra.mxu0 %v34
    %158 = vmatpush.msra.mxu0 %v33
    %159 = vmatpush.msra.mxu0 %v32
    %160 = vmatpush.msra.mxu0 %v31
    %161 = vmatpush.msra.mxu0 %v30
    %162 = vmatmul.f32.gmra.mxu0 %v144
    %v163 = vpop.f32.mrf.mxu0
    %v164 = vadd.f32 0.0, %v163
    %165 = vdwg.mxu0
    %v166 = vrot.slane %v164, 4
    %v167 = vadd.f32 %v164, %v166
    %v168 = vrot.slane %v167, 2
    %v169 = vadd.f32 %v167, %v168
    %v170 = vrot.slane %v169, 1
    %v171 = vadd.f32 %v169, %v170
    %v172 = vmul.f32 %v164, %v164
    %v173 = vrot.slane %v172, 4
    %v174 = vadd.f32 %v172, %v173
    %v175 = vrot.slane %v174, 2
    %v176 = vadd.f32 %v174, %v175
    %v177 = vrot.slane %v176, 1
    %v178 = vadd.f32 %v176, %v177
    %v179 = vmul.f32 %v171, 0.125
    %v180 = vmul.f32 %v178, 0.125
    %v181 = vmul.f32 %v179, %v179
    %v182 = vsub.f32 %v180, %v181
    %v183 = vmax.f32 %v182, 0.0
    %v184 = vadd.f32 %v183, 1e-05
    %v185 = vrsqrt.pop %v184
    %v186 = vmul.f32 %v185, %v184
    %v187 = vmul.f32 %v186, %v185
    %v188 = vmul.f32 0.5, %v187
    %v189 = vsub.f32 1.5, %v188
    %v190 = vmul.f32 %v185, %v189
    %vm191 = vweird.f32 %v184
    %vm192 = vweird.f32 %v185
    %vm193 = vmor %vm191, %vm192
    %v194 = vsel %vm193, %v185, %v190
    %v195 = vmul.f32 %v28, %v194
    %v196 = vmul.f32 %v179, %v195
    %v198 = vrot.slane %v196, 7
    %v200 = vsub.f32 %v28, %v198
    %v201 = vperm.slane %v195, 4
    %v202 = vmul.f32 %v164, %v201
    %v203 = vperm.slane %v200, 5
    %v204 = vadd.f32 %v202, %v203
    %v205 = vmax.f32 %v204, 0.0
    %v206 = vperm.slane %v28, 6
    %207 = vmatpush.msra.mxu0 %v53
    %208 = vmatpush.msra.mxu0 %v52
    %209 = vmatpush.msra.mxu0 %v51
    %210 = vmatpush.msra.mxu0 %v50
    %211 = vmatpush.msra.mxu0 %v49
    %212 = vmatpush.msra.mxu0 %v48
    %213 = vmatpush.msra.mxu0 %v47
    %214 = vmatpush.msra.mxu0 %v46
    %215 = vmatpush.msra.mxu0 %v45
    %216 = vmatpush.msra.mxu0 %v44
    %217 = vmatpush.msra.mxu0 %v43
    %218 = vmatpush.msra.mxu0 %v42
    %219 = vmatpush.msra.mxu0 %v41
    %220 = vmatpush.msra.mxu0 %v40
    %221 = vmatpush.msra.mxu0 %v39
    %222 = vmatpush.msra.mxu0 %v38
    %223 = vmatmul.f32.gmra.mxu0 %v205
    %v224 = vpop.f32.mrf.mxu0
    %v225 = vadd.f32 %v206, %v224
    %226 = vdwg.mxu0
    %v227 = vmax.f32 %v225, 0.0
    %v228 = vperm.slane %v28, 7
    %229 = vmatpush.msra.mxu0 %v69
    %230 = vmatpush.msra.mxu0 %v68
    %231 = vmatpush.msra.mxu0 %v67
    %232 = vmatpush.msra.mxu0 %v66
    %233 = vmatpush.msra.mxu0 %v65
    %234 = vmatpush.msra.mxu0 %v64
    %235 = vmatpush.msra.mxu0 %v63
    %236 = vmatpush.msra.mxu0 %v62
    %237 = vmatpush.msra.mxu0 %v61
    %238 = vmatpush.msra.mxu0 %v60
    %239 = vmatpush.msra.mxu0 %v59
    %240 = vmatpush.msra.mxu0 %v58
    %241 = vmatpush.msra.mxu0 %v57
    %242 = vmatpush.msra.mxu0 %v56
    %243 = vmatpush.msra.mxu0 %v55
    %244 = vmatpush.msra.mxu0 %v54
    %245 = vmatmul.f32.gmra.mxu0 %v227
    %v246 = vpop.f32.mrf.mxu0
    %v247 = vadd.f32 %v228, %v246
    %248 = vdwg.mxu0
    %v249 = vmax.f32 %v247, 0.0
    %v250 = vperm.slane %v29, 0
    %251 = vmatpush.msra.mxu0 %v85
    %252 = vmatpush.msra.mxu0 %v84
    %253 = vmatpush.msra.mxu0 %v83
    %254 = vmatpush.msra.mxu0 %v82
    %255 = vmatpush.msra.mxu0 %v81
    %256 = vmatpush.msra.mxu0 %v80
    %257 = vmatpush.msra.mxu0 %v79
    %258 = vmatpush.msra.mxu0 %v78
    %259 = vmatpush.msra.mxu0 %v77
    %260 = vmatpush.msra.mxu0 %v76
    %261 = vmatpush.msra.mxu0 %v75
    %262 = vmatpush.msra.mxu0 %v74
    %263 = vmatpush.msra.mxu0 %v73
    %264 = vmatpush.msra.mxu0 %v72
    %265 = vmatpush.msra.mxu0 %v71
    %266 = vmatpush.msra.mxu0 %v70
    %267 = vmatmul.f32.gmra.mxu0 %v249
    %v268 = vpop.f32.mrf.mxu0
    %v269 = vadd.f32 %v250, %v268
    %270 = vdwg.mxu0
    %vm271 = vcmask 15360
    %272 = vst.msk [vmem:[%s2] sm:$0xff] %vm271, %v269
    // Predicated region
    $region14: #{tpu_custom_call.1} parent=1 // pred_check
      _
    $region15: #{tpu_custom_call.1} parent=1 // pred_check_branch
      %274 = sbr.rel (0) target = $region17
    $region16: #{tpu_custom_call.1} parent=1 // pred_region
      _
    $region17: #{tpu_custom_call.1} parent=1 // pred_fallthru
      _
    // Predicated region
    $region18: #{tpu_custom_call.1} parent=1 // pred_check
      _
    $region19: #{tpu_custom_call.1} parent=1 // pred_check_branch
      %276 = sbr.rel (0) target = $region21
    $region20: #{tpu_custom_call.1} parent=1 // pred_region
      _
    $region21: #{tpu_custom_call.1} parent=1 // pred_fallthru
      _
    %277 = vsyncpa [#allocation3], 1

</llo_original>
